<compile_context>
chip_gen: v7x
topology: tpu7x:2x2x1
jax: 0.10.0
libtpu: 0.0.40
codegen_flags: <defaults>
</compile_context>

<pallas_src>
import jax
import jax.numpy as jnp
from jax.experimental import pallas as pl
from jax.experimental.pallas import tpu as pltpu


# ---------------------------------------------------------------------------
# Fused FeedForward kernel:  out = (x @ W1 + b1) @ W2 + b2
# ---------------------------------------------------------------------------

def _ff_fused_kernel(x_ref, w1_ref, b1_ref, w2_ref, b2_ref, o_ref, acc_ref):
    """One (tm, d_model) output tile; grid axis 1 walks d_hidden chunks."""
    j = pl.program_id(1)

    @pl.when(j == 0)
    def _():
        acc_ref[...] = jnp.zeros_like(acc_ref)

    # First projection chunk: (tm, D) @ (D, th) on the MXU, f32 accumulate.
    h = jnp.dot(x_ref[...], w1_ref[...], preferred_element_type=jnp.float32)
    h = h + b1_ref[...]          # f32 bias add (VPU)
    # Dropout is identity in eval mode; no activation in the reference forward().

    # Second projection chunk: (tm, th) @ (th, D), accumulated in f32 VMEM.
    acc_ref[...] += jnp.dot(h.astype(w2_ref.dtype), w2_ref[...],
                            preferred_element_type=jnp.float32)

    @pl.when(j == pl.num_programs(1) - 1)
    def _():
        o_ref[...] = (acc_ref[...] + b2_ref[...]).astype(o_ref.dtype)


def _pick_tile(total, preferred):
    """Largest-that-fits tile: use `preferred` if it divides `total`, else full."""
    if total >= preferred and total % preferred == 0:
        return preferred
    return total


def feed_forward(x, params, *, tile_m=256, tile_h=512,
                 compute_dtype=jnp.bfloat16):
    """FeedForward forward pass.  x: (..., d_model) -> (..., d_model)."""
    orig_shape = x.shape
    d_model = orig_shape[-1]
    x2d = x.reshape(-1, d_model)
    M = x2d.shape[0]

    w1, b1, w2, b2 = params["w1"], params["b1"], params["w2"], params["b2"]
    H = w1.shape[1]

    tm = _pick_tile(M, tile_m)
    th = _pick_tile(H, tile_h)
    grid = (M // tm, H // th)

    # bf16 operands for the MXU; accumulation stays f32. Biases stay f32.
    x_c = x2d.astype(compute_dtype)
    w1_c = w1.astype(compute_dtype)
    w2_c = w2.astype(compute_dtype)
    b1_2d = b1.reshape(1, H).astype(jnp.float32)
    b2_2d = b2.reshape(1, d_model).astype(jnp.float32)

    # Explicit VMEM budget: double-buffered inputs/outputs + f32 accumulator
    # + intermediate, with 2x headroom, capped below v7x's 64 MiB physical.
    isz = jnp.dtype(compute_dtype).itemsize
    osz = jnp.dtype(x.dtype).itemsize
    tile_bytes = (
        2 * tm * d_model * isz        # x tiles (double-buffered)
        + 2 * d_model * th * isz      # W1 tiles
        + 2 * th * 4                  # b1 tiles (f32)
        + 2 * th * d_model * isz      # W2 tiles
        + 2 * d_model * 4             # b2 tiles (f32)
        + 2 * tm * d_model * osz      # output tiles
        + tm * d_model * 4            # f32 accumulator scratch
        + tm * th * 4                 # f32 intermediate h
    )
    vmem_limit = int(min(max(2 * tile_bytes, 4 << 20), 48 << 20))

    out2d = pl.pallas_call(
        _ff_fused_kernel,
        out_shape=jax.ShapeDtypeStruct((M, d_model), x.dtype),
        grid_spec=pltpu.PrefetchScalarGridSpec(
            num_scalar_prefetch=0,
            grid=grid,
            in_specs=[
                pl.BlockSpec((tm, d_model), lambda i, j: (i, 0)),   # x
                pl.BlockSpec((d_model, th), lambda i, j: (0, j)),   # W1
                pl.BlockSpec((1, th),       lambda i, j: (0, j)),   # b1
                pl.BlockSpec((th, d_model), lambda i, j: (j, 0)),   # W2
                pl.BlockSpec((1, d_model),  lambda i, j: (0, 0)),   # b2
            ],
            out_specs=pl.BlockSpec((tm, d_model), lambda i, j: (i, 0)),
            scratch_shapes=[pltpu.VMEM((tm, d_model), jnp.float32)],
        ),
        compiler_params=pltpu.CompilerParams(
            dimension_semantics=("parallel", "arbitrary"),
            vmem_limit_bytes=vmem_limit,
        ),
    )(x_c, w1_c, b1_2d, w2_c, b2_2d)
    return out2d.reshape(orig_shape)


# ---------------------------------------------------------------------------
# Pure-JAX reference (same bf16-operand / f32-accumulate numerics)
# ---------------------------------------------------------------------------

def feed_forward_ref(x, params, compute_dtype=jnp.bfloat16):
    d_model = x.shape[-1]
    x2d = x.reshape(-1, d_model).astype(compute_dtype)
    h = jnp.dot(x2d, params["w1"].astype(compute_dtype),
                preferred_element_type=jnp.float32) + params["b1"]
    out = jnp.dot(h.astype(compute_dtype), params["w2"].astype(compute_dtype),
                  preferred_element_type=jnp.float32) + params["b2"]
    return out.astype(x.dtype).reshape(x.shape)


# ---------------------------------------------------------------------------
# Deterministic parameter initialization
# ---------------------------------------------------------------------------

def init_feed_forward(key, d_model, d_hidden, scale=0.05):
    k1, k2, k3, k4 = jax.random.split(key, 4)
    return {
        "w1": jax.random.normal(k1, (d_model, d_hidden), jnp.float32) * scale,
        "b1": jax.random.normal(k2, (d_hidden,), jnp.float32) * scale,
        "w2": jax.random.normal(k3, (d_hidden, d_model), jnp.float32) * scale,
        "b2": jax.random.normal(k4, (d_model,), jnp.float32) * scale,
    }


if __name__ == "__main__":
    d_model = 32       # FeedForward d_model
    d_hidden = 64      # FeedForward d_hidden
    batch, seq = 2, 8  # token axes; flattened to M = 16 rows

    root = jax.random.PRNGKey(0)
    k_x, k_p = jax.random.split(root)

    x = jax.random.normal(k_x, (batch, seq, d_model), jnp.float32)
    params = init_feed_forward(k_p, d_model, d_hidden)

    out = jax.block_until_ready(feed_forward(x, params))
    ref = jax.block_until_ready(feed_forward_ref(x, params))

    assert out.shape == (batch, seq, d_model)
    assert jnp.all(jnp.isfinite(out))
    assert jnp.allclose(out, ref, atol=2e-2, rtol=2e-2), \
        float(jnp.max(jnp.abs(out - ref)))
    print("KERNEL_OK")
</pallas_src>

<mosaic_0001>
module attributes {stable_mosaic.version = 11 : i64} {
  func.func @_ff_fused_kernel(%arg0: i32, %arg1: i32, %arg2: memref<16x32xbf16, #tpu.memory_space<vmem>>, %arg3: memref<32x64xbf16, #tpu.memory_space<vmem>>, %arg4: memref<1x64xf32, #tpu.memory_space<vmem>>, %arg5: memref<64x32xbf16, #tpu.memory_space<vmem>>, %arg6: memref<1x32xf32, #tpu.memory_space<vmem>>, %arg7: memref<16x32xf32, #tpu.memory_space<vmem>>, %arg8: memref<16x32xf32, #tpu.memory_space<vmem>>) attributes {dimension_semantics = [#tpu.dimension_semantics<parallel>, #tpu.dimension_semantics<arbitrary>], iteration_bounds = array<i64: 1, 1>, scalar_prefetch = 0 : i64, scratch_operands = 1 : i64, tpu.core_type = #tpu.core_type<tc>, window_params = [{transform_indices = @transform_0, window_bounds = array<i64: 16, 32>}, {transform_indices = @transform_1, window_bounds = array<i64: 32, 64>}, {transform_indices = @transform_2, window_bounds = array<i64: 1, 64>}, {transform_indices = @transform_3, window_bounds = array<i64: 64, 32>}, {pipeline_mode = #tpu.pipeline_mode<synchronous>, transform_indices = @transform_4, window_bounds = array<i64: 1, 32>}, {transform_indices = @transform_5, window_bounds = array<i64: 16, 32>}]} {
    %c0_i32 = arith.constant 0 : i32
    %0 = arith.cmpi eq, %arg1, %c0_i32 : i32
    %1 = arith.extui %0 : i1 to i32
    %c0_i32_0 = arith.constant 0 : i32
    %2 = arith.cmpi ne, %1, %c0_i32_0 : i32
    scf.if %2 {
      %cst_15 = arith.constant 0.000000e+00 : f32
      %18 = vector.broadcast %cst_15 : f32 to vector<16x32xf32>
      %c0_16 = arith.constant 0 : index
      %c0_17 = arith.constant 0 : index
      %19 = vector.load %arg8[%c0_16, %c0_17] : memref<16x32xf32, #tpu.memory_space<vmem>>, vector<16x32xf32>
      tpu.vector_store %arg8[%c0_16, %c0_17], %18 {strides = array<i32>} : memref<16x32xf32, #tpu.memory_space<vmem>>, vector<16x32xf32>,
    } else {
    }
    %c0 = arith.constant 0 : index
    %c0_1 = arith.constant 0 : index
    %3 = vector.load %arg2[%c0, %c0_1] : memref<16x32xbf16, #tpu.memory_space<vmem>>, vector<16x32xbf16>
    %c0_2 = arith.constant 0 : index
    %c0_3 = arith.constant 0 : index
    %4 = vector.load %arg3[%c0_2, %c0_3] : memref<32x64xbf16, #tpu.memory_space<vmem>>, vector<32x64xbf16>
    %cst = arith.constant dense<0.000000e+00> : vector<16x64xf32>
    %5 = tpu.matmul %3, %4, %cst {dimension_numbers = #tpu.dot_dimension_numbers<[1], [0], [0], [1], [0, 0, 1, 1], [], []>} : vector<16x32xbf16>, vector<32x64xbf16>, vector<16x64xf32> -> vector<16x64xf32>
    %c0_4 = arith.constant 0 : index
    %c0_5 = arith.constant 0 : index
    %6 = vector.load %arg4[%c0_4, %c0_5] : memref<1x64xf32, #tpu.memory_space<vmem>>, vector<1x64xf32>
    %7 = vector.broadcast %6 : vector<1x64xf32> to vector<16x64xf32>
    %8 = arith.addf %5, %7 : vector<16x64xf32>
    %c0_6 = arith.constant 0 : index
    %c0_7 = arith.constant 0 : index
    %9 = vector.load %arg8[%c0_6, %c0_7] : memref<16x32xf32, #tpu.memory_space<vmem>>, vector<16x32xf32>
    %10 = arith.truncf %8 : vector<16x64xf32> to vector<16x64xbf16>
    %c0_8 = arith.constant 0 : index
    %c0_9 = arith.constant 0 : index
    %11 = vector.load %arg5[%c0_8, %c0_9] : memref<64x32xbf16, #tpu.memory_space<vmem>>, vector<64x32xbf16>
    %cst_10 = arith.constant dense<0.000000e+00> : vector<16x32xf32>
    %12 = tpu.matmul %10, %11, %cst_10 {dimension_numbers = #tpu.dot_dimension_numbers<[1], [0], [0], [1], [0, 0, 1, 1], [], []>} : vector<16x64xbf16>, vector<64x32xbf16>, vector<16x32xf32> -> vector<16x32xf32>
    %13 = arith.addf %9, %12 : vector<16x32xf32>
    %c0_11 = arith.constant 0 : index
    %c0_12 = arith.constant 0 : index
    %14 = vector.load %arg8[%c0_11, %c0_12] : memref<16x32xf32, #tpu.memory_space<vmem>>, vector<16x32xf32>
    tpu.vector_store %arg8[%c0_11, %c0_12], %13 {strides = array<i32>} : memref<16x32xf32, #tpu.memory_space<vmem>>, vector<16x32xf32>,
    %c0_i32_13 = arith.constant 0 : i32
    %15 = arith.cmpi eq, %arg1, %c0_i32_13 : i32
    %16 = arith.extui %15 : i1 to i32
    %c0_i32_14 = arith.constant 0 : i32
    %17 = arith.cmpi ne, %16, %c0_i32_14 : i32
    scf.if %17 {
      %c0_15 = arith.constant 0 : index
      %c0_16 = arith.constant 0 : index
      %18 = vector.load %arg8[%c0_15, %c0_16] : memref<16x32xf32, #tpu.memory_space<vmem>>, vector<16x32xf32>
      %c0_17 = arith.constant 0 : index
      %c0_18 = arith.constant 0 : index
      %19 = vector.load %arg6[%c0_17, %c0_18] : memref<1x32xf32, #tpu.memory_space<vmem>>, vector<1x32xf32>
      %20 = vector.broadcast %19 : vector<1x32xf32> to vector<16x32xf32>
      %21 = arith.addf %18, %20 : vector<16x32xf32>
      %c0_19 = arith.constant 0 : index
      %c0_20 = arith.constant 0 : index
      %22 = vector.load %arg7[%c0_19, %c0_20] : memref<16x32xf32, #tpu.memory_space<vmem>>, vector<16x32xf32>
      tpu.vector_store %arg7[%c0_19, %c0_20], %21 {strides = array<i32>} : memref<16x32xf32, #tpu.memory_space<vmem>>, vector<16x32xf32>,
    } else {
    }
    return
  }
  func.func @transform_0(%arg0: i32, %arg1: i32) -> (i32, i32) {
    %c0_i32 = arith.constant 0 : i32
    %c0_i32_0 = arith.constant 0 : i32
    return %arg0, %c0_i32 : i32, i32
  }
  func.func @transform_1(%arg0: i32, %arg1: i32) -> (i32, i32) {
    %c0_i32 = arith.constant 0 : i32
    %c0_i32_0 = arith.constant 0 : i32
    return %c0_i32, %arg1 : i32, i32
  }
  func.func @transform_2(%arg0: i32, %arg1: i32) -> (i32, i32) {
    %c0_i32 = arith.constant 0 : i32
    %c0_i32_0 = arith.constant 0 : i32
    return %c0_i32, %arg1 : i32, i32
  }
  func.func @transform_3(%arg0: i32, %arg1: i32) -> (i32, i32) {
    %c0_i32 = arith.constant 0 : i32
    %c0_i32_0 = arith.constant 0 : i32
    return %arg1, %c0_i32 : i32, i32
  }
  func.func @transform_4(%arg0: i32, %arg1: i32) -> (i32, i32) {
    %c0_i32 = arith.constant 0 : i32
    %c0_i32_0 = arith.constant 0 : i32
    %c0_i32_1 = arith.constant 0 : i32
    return %c0_i32, %c0_i32_0 : i32, i32
  }
  func.func @transform_5(%arg0: i32, %arg1: i32) -> (i32, i32) {
    %c0_i32 = arith.constant 0 : i32
    %c0_i32_0 = arith.constant 0 : i32
    return %arg0, %c0_i32 : i32, i32
  }
}

</mosaic_0001>

<llo_original>
// kernel: tpu_custom_call.1
$region0: #{tpu_custom_call.1}
  #allocation0 [shape = 'u32[]', space=smem, size = 0x4, offset = 0x4, fixed_abs, tag = 'smem constant byte address 0x4 - core index']
  #allocation1 [shape = 'u32[144,128]{1,0:T(1,128)}', space=vmem, size = 0x12000, scoped, tag = 'internal scratch']
  #allocation2 [shape = 'f32[16,32]{1,0:T(8,128)}', space=vmem, size = 0x2000, scoped, tag = 'scratch operand']
  %s0 = inlined_call_operand.vmem [shape: bf16[16,32], index: 0, kind: input, shape index: {}]
  %s1 = inlined_call_operand.vmem [shape: bf16[32,64], index: 1, kind: input, shape index: {}]
  %s2 = inlined_call_operand.vmem [shape: f32[1,64], index: 2, kind: input, shape index: {}]
  %s3 = inlined_call_operand.vmem [shape: bf16[64,32], index: 3, kind: input, shape index: {}]
  %s4 = inlined_call_operand.vmem [shape: f32[1,32], index: 4, kind: input, shape index: {}]
  %s5 = inlined_call_operand.hbm [shape: f32[16,32], index: 5, kind: output, shape index: {}]
  %s6 = sld [smem:[#allocation0]]
  $region38: #{tpu_custom_call.1} parent=0
    _
  %s8 = ssub.s32 1, %s6
  %s9 = scalar_select 0, %s8, %s6
  $region1: #{tpu_custom_call.1} parent=0
    #allocation3 [shape = 'u8[8192]{0}', space=vmem, size = 0x2000, scoped, tag = 'output window, operand 0, single buffered']
    #allocation4 [shape = 's32[1]{0}', space=sflag, size = 0x4, scoped, tag = 'scoped memory for tpu_custom_call.1']
    %10 = vsyncpa [#allocation4], 0
    // Predicated region
    $region2: #{tpu_custom_call.1} parent=1 // pred_check
      _
    $region3: #{tpu_custom_call.1} parent=1 // pred_check_branch
      %12 = sbr.rel (0) target = $region5
    $region4: #{tpu_custom_call.1} parent=1 // pred_region
      _
    $region5: #{tpu_custom_call.1} parent=1 // pred_fallthru
      _
    // Predicated region
    $region6: #{tpu_custom_call.1} parent=1 // pred_check
      _
    $region7: #{tpu_custom_call.1} parent=1 // pred_check_branch
      %14 = sbr.rel (0) target = $region9
    $region8: #{tpu_custom_call.1} parent=1 // pred_region
      _
    $region9: #{tpu_custom_call.1} parent=1 // pred_fallthru
      _
    // Predicated region
    $region10: #{tpu_custom_call.1} parent=1 // pred_check
      _
    $region11: #{tpu_custom_call.1} parent=1 // pred_check_branch
      %16 = sbr.rel (0) target = $region13
    $region12: #{tpu_custom_call.1} parent=1 // pred_region
      _
    $region13: #{tpu_custom_call.1} parent=1 // pred_fallthru
      _
    // Predicated region
    $region14: #{tpu_custom_call.1} parent=1 // pred_check
      _
    $region15: #{tpu_custom_call.1} parent=1 // pred_check_branch
      %18 = sbr.rel (0) target = $region17
    $region16: #{tpu_custom_call.1} parent=1 // pred_region
      _
    $region17: #{tpu_custom_call.1} parent=1 // pred_fallthru
      _
    // Predicated region
    $region18: #{tpu_custom_call.1} parent=1 // pred_check
      _
    $region19: #{tpu_custom_call.1} parent=1 // pred_check_branch
      %20 = sbr.rel (0) target = $region21
    $region20: #{tpu_custom_call.1} parent=1 // pred_region
      _
    $region21: #{tpu_custom_call.1} parent=1 // pred_fallthru
      _
    %p22 = scmp.eq.s32.totalorder 0, 0
    // Predicated region
    $region22: #{tpu_custom_call.1} parent=1 // pred_check
      %p23 = pneg %p22
    $region23: #{tpu_custom_call.1} parent=1 // pred_check_branch
      %25 = sbr.rel (%p23) target = $region25
    $region24: #{tpu_custom_call.1} parent=1 // pred_region
      %vm26 = vcmask 261120
      %27 = vst.msk [vmem:[#allocation2] sm:$0xff] %vm26, 0.0
      %28 = vst.msk [vmem:[#allocation2 + $0x8] sm:$0xff] %vm26, 0.0
    $region25: #{tpu_custom_call.1} parent=1 // pred_fallthru
      _
    %v29 = vld [vmem:[%s0] sm:$0xf]
    %v30 = vld [vmem:[%s0 + $0x4] sm:$0xf]
    %v31 = vld [vmem:[%s1] sm:$0xf]
    %v32 = vld [vmem:[%s1 + $0x4] sm:$0xf]
    %v33 = vld [vmem:[%s1 + $0x8] sm:$0xf]
    %v34 = vld [vmem:[%s1 + $0xc] sm:$0xf]
    %v35 = vld [vmem:[%s2] sm:$0x1]
    %v37 = vlaneseq
    %v38 = vshrl.u32 %v37, 7
    %v39 = vsub.s32 0, %v38
    %v40 = vrot.slane %v35, %v39
    %v44 = vunpack.c.l.b16 %v29
    %v45 = vunpack.c.l.b16 %v30
    %v46 = vpack.c.b16 %v45, %v44
    %v51 = vunpack.c.l.b16 %v31
    %v52 = vunpack.c.l.b16 %v32
    %v53 = vunpack.c.l.b16 %v33
    %v54 = vunpack.c.l.b16 %v34
    %v55 = vpack.c.b16 %v52, %v51
    %v56 = vpack.c.b16 %v54, %v53
    %vm59 = vcmask 261120
    %v61 = vsel %vm59, %v46, 0
    %63 = vmatprep.subr.bf16.mxu0 0
    %64 = vmatpush1.bf16.msra.mxu0 %v55
    %65 = vmatprep.subr.bf16.mxu0 0
    %66 = vmatpush1.bf16.msra.mxu0 %v56
    %67 = vmatprep.subr.bf16.mxu0 0
    %68 = vmatpush1.bf16.msra.mxu0 0
    %69 = vmatprep.subr.bf16.mxu0 0
    %70 = vmatpush1.bf16.msra.mxu0 0
    %71 = vmatprep.subr.bf16.mxu0 0
    %72 = vmatpush1.bf16.msra.mxu0 0
    %73 = vmatprep.subr.bf16.mxu0 0
    %74 = vmatpush1.bf16.msra.mxu0 0
    %75 = vmatprep.subr.bf16.mxu0 0
    %76 = vmatpush1.bf16.msra.mxu0 0
    %77 = vmatprep.subr.bf16.mxu0 0
    %78 = vmatpush1.bf16.msra.mxu0 0
    %79 = vmatprep.subr.bf16.mxu0 0
    %80 = vmatpush1.bf16.msra.mxu0 0
    %81 = vmatprep.subr.bf16.mxu0 0
    %82 = vmatpush1.bf16.msra.mxu0 0
    %83 = vmatprep.subr.bf16.mxu0 0
    %84 = vmatpush1.bf16.msra.mxu0 0
    %85 = vmatprep.subr.bf16.mxu0 0
    %86 = vmatpush1.bf16.msra.mxu0 0
    %87 = vmatprep.subr.bf16.mxu0 0
    %88 = vmatpush1.bf16.msra.mxu0 0
    %89 = vmatprep.subr.bf16.mxu0 0
    %90 = vmatpush1.bf16.msra.mxu0 0
    %91 = vmatprep.subr.bf16.mxu0 0
    %92 = vmatpush1.bf16.msra.mxu0 0
    %93 = vmatprep.subr.bf16.mxu0 0
    %94 = vmatpush1.bf16.msra.mxu0 0
    %95 = vmatprep.mubr.bf16.mxu0 0
    %96 = vmatmul.mubr.bf16.gmra.mrb[0].mxu0 %v61
    %v97 = vpop.f32.mrb[0].mxu0
    %v98 = vadd.f32 %v40, %v97
    %v99 = vpop.f32.mrb[0].mxu0
    %v100 = vpop.f32.mrb[0].mxu0
    %v101 = vadd.f32 %v40, %v100
    %v102 = vpop.f32.mrb[0].mxu0
    %103 = vdwg.mxu0
    %v104 = vld [vmem:[#allocation2] sm:$0xff]
    %v105 = vld [vmem:[#allocation2 + $0x8] sm:$0xff]
    %v106 = vpack.c.bf16 %v101, %v98
    %v107 = vld [vmem:[%s3] sm:$0xf]
    %v108 = vld [vmem:[%s3 + $0x4] sm:$0xf]
    %v109 = vld [vmem:[%s3 + $0x8] sm:$0xf]
    %v110 = vld [vmem:[%s3 + $0xc] sm:$0xf]
    %v111 = vld [vmem:[%s3 + $0x10] sm:$0xf]
    %v112 = vld [vmem:[%s3 + $0x14] sm:$0xf]
    %v113 = vld [vmem:[%s3 + $0x18] sm:$0xf]
    %v114 = vld [vmem:[%s3 + $0x1c] sm:$0xf]
    %v123 = vunpack.c.l.b16 %v107
    %v124 = vunpack.c.l.b16 %v108
    %v125 = vunpack.c.l.b16 %v109
    %v126 = vunpack.c.l.b16 %v110
    %v127 = vunpack.c.l.b16 %v111
    %v128 = vunpack.c.l.b16 %v112
    %v129 = vunpack.c.l.b16 %v113
    %v130 = vunpack.c.l.b16 %v114
    %v131 = vpack.c.b16 %v124, %v123
    %v132 = vpack.c.b16 %v126, %v125
    %v133 = vpack.c.b16 %v128, %v127
    %v134 = vpack.c.b16 %v130, %v129
    %vm139 = vcmask 523264
    %v141 = vsel %vm139, %v106, 0
    %143 = vmatprep.subr.bf16.mxu0 0
    %144 = vmatpush1.bf16.msra.mxu0 %v131
    %145 = vmatprep.subr.bf16.mxu0 0
    %146 = vmatpush1.bf16.msra.mxu0 %v132
    %147 = vmatprep.subr.bf16.mxu0 0
    %148 = vmatpush1.bf16.msra.mxu0 %v133
    %149 = vmatprep.subr.bf16.mxu0 0
    %150 = vmatpush1.bf16.msra.mxu0 %v134
    %151 = vmatprep.subr.bf16.mxu0 0
    %152 = vmatpush1.bf16.msra.mxu0 0
    %153 = vmatprep.subr.bf16.mxu0 0
    %154 = vmatpush1.bf16.msra.mxu0 0
    %155 = vmatprep.subr.bf16.mxu0 0
    %156 = vmatpush1.bf16.msra.mxu0 0
    %157 = vmatprep.subr.bf16.mxu0 0
    %158 = vmatpush1.bf16.msra.mxu0 0
    %159 = vmatprep.subr.bf16.mxu0 0
    %160 = vmatpush1.bf16.msra.mxu0 0
    %161 = vmatprep.subr.bf16.mxu0 0
    %162 = vmatpush1.bf16.msra.mxu0 0
    %163 = vmatprep.subr.bf16.mxu0 0
    %164 = vmatpush1.bf16.msra.mxu0 0
    %165 = vmatprep.subr.bf16.mxu0 0
    %166 = vmatpush1.bf16.msra.mxu0 0
    %167 = vmatprep.subr.bf16.mxu0 0
    %168 = vmatpush1.bf16.msra.mxu0 0
    %169 = vmatprep.subr.bf16.mxu0 0
    %170 = vmatpush1.bf16.msra.mxu0 0
    %171 = vmatprep.subr.bf16.mxu0 0
    %172 = vmatpush1.bf16.msra.mxu0 0
    %173 = vmatprep.subr.bf16.mxu0 0
    %174 = vmatpush1.bf16.msra.mxu0 0
    %175 = vmatprep.mubr.bf16.mxu0 0
    %176 = vmatmul.mubr.bf16.gmra.mrb[0].mxu0 %v141
    %v177 = vpop.f32.mrb[0].mxu0
    %v178 = vadd.f32 0.0, %v177
    %v179 = vpop.f32.mrb[0].mxu0
    %v180 = vpop.f32.mrb[0].mxu0
    %v181 = vadd.f32 0.0, %v180
    %v182 = vpop.f32.mrb[0].mxu0
    %183 = vdwg.mxu0
    %v184 = vadd.f32 %v104, %v178
    %v185 = vadd.f32 %v105, %v181
    %186 = vst.msk [vmem:[#allocation2] sm:$0xff] %vm59, %v184
    %187 = vst.msk [vmem:[#allocation2 + $0x8] sm:$0xff] %vm59, %v185
    // Predicated region
    $region26: #{tpu_custom_call.1} parent=1 // pred_check
      %p188 = pneg %p22
    $region27: #{tpu_custom_call.1} parent=1 // pred_check_branch
      %190 = sbr.rel (%p188) target = $region29
    $region28: #{tpu_custom_call.1} parent=1 // pred_region
      %v191 = vld [vmem:[#allocation2] sm:$0xff]
      %v192 = vld [vmem:[#allocation2 + $0x8] sm:$0xff]
      %v193 = vld [vmem:[%s4] sm:$0x1]
      %v195 = vlaneseq
      %v196 = vshrl.u32 %v195, 7
      %v197 = vsub.s32 0, %v196
      %v198 = vrot.slane %v193, %v197
      %v200 = vadd.f32 %v191, %v198
      %v201 = vadd.f32 %v192, %v198
      %202 = vst.msk [vmem:[#allocation3] sm:$0xff] %vm59, %v200
      %203 = vst.msk [vmem:[#allocation3 + $0x8] sm:$0xff] %vm59, %v201
    $region29: #{tpu_custom_call.1} parent=1 // pred_fallthru
      _
    // Predicated region
    $region30: #{tpu_custom_call.1} parent=1 // pred_check
      _
    $region31: #{tpu_custom_call.1} parent=1 // pred_check_branch
      %205 = sbr.rel (0) target = $region33
    $region32: #{tpu_custom_call.1} parent=1 // pred_region
      %s207 = ssub.s32 256, 256
      %208 = vsyncadd [#allocation4], %s207
      %s209 = sshll.u32 [#allocation3], 4
      %s210 = int_to_ptr.vmem [resolvable:$true] %s209
      %215 = dma.vmem_to_hbm [thread:$0]  %s210, 256, %s5, [#allocation4], 128, 128, 8
    $region33: #{tpu_custom_call.1} parent=1 // pred_fallthru
      _
    // Predicated region
    $region34: #{tpu_custom_call.1} parent=1 // pred_check
      _
    $region35: #{tpu_custom_call.1} parent=1 // pred_check_branch
      %217 = sbr.rel (0) target = $region37
    $region36: #{tpu_custom_call.1} parent=1 // pred_region
      %218 = dma.done [#allocation4], 256
    $region37: #{tpu_custom_call.1} parent=1 // pred_fallthru
      _
    %219 = vsyncpa [#allocation4], 1

</llo_original>
